<compile_context>
chip_gen: v7x
topology: tpu7x:2x2x1
jax: 0.10.0
libtpu: 0.0.40
codegen_flags: <defaults>
</compile_context>

<pallas_src>
import jax
import jax.numpy as jnp
from jax.experimental import pallas as pl
from jax.experimental.pallas import tpu as pltpu


def _global_sa_kernel(feat_ref, w1_ref, b1_ref, w2_ref, b2_ref, w3_ref, b3_ref,
                      o_ref, acc_ref):
    t = pl.program_id(1)

    f = feat_ref[0].astype(jnp.float32)                                   # (tile_n, C1)

    # Shared per-point MLP: three Linear+ReLU layers, each a full-tile MXU matmul.
    h = jnp.maximum(
        jnp.dot(f, w1_ref[...], preferred_element_type=jnp.float32) + b1_ref[...], 0.0)
    h = jnp.maximum(
        jnp.dot(h, w2_ref[...], preferred_element_type=jnp.float32) + b2_ref[...], 0.0)
    h = jnp.maximum(
        jnp.dot(h, w3_ref[...], preferred_element_type=jnp.float32) + b3_ref[...], 0.0)
    # TODO(synk): eval-mode BatchNorm1d (per-channel affine after each ReLU in the
    # reference MLP) is not instantiated; fold its scale/shift here if needed.

    tile_max = jnp.max(h, axis=0, keepdims=True)                          # (1, C_out)

    # Running per-graph max across point tiles (reduction axis = grid axis 1).
    @pl.when(t == 0)
    def _():
        acc_ref[...] = jnp.full_like(acc_ref, -jnp.inf)

    acc_ref[...] = jnp.maximum(acc_ref[...], tile_max)

    @pl.when(t == pl.num_programs(1) - 1)
    def _():
        o_ref[0] = acc_ref[...].astype(o_ref.dtype)


def global_sa_module(x, pos, batch, W1, b1, W2, b2, W3, b3, *, tile_n=64):
    """GlobalSAModule forward with nn = 3-layer Linear+ReLU MLP.

    x:     (Ntot, C_in)   per-point features
    pos:   (Ntot, 3)      per-point positions
    batch: (Ntot,)        sorted graph index per point (equal-size graphs assumed)
    W1:    (C_in + 3, H1) first Linear of `nn`, acting on cat([x, pos], dim=1)
    Returns (pooled (B, C_out), pos_out (B, 3) zeros, batch_out (B,) arange) like the module.
    """
    Ntot, C_in = x.shape
    B = int(batch[-1]) + 1
    # TODO(synk): ragged graphs (unequal point counts) would need scalar-prefetch
    # segment offsets; equal-size sorted batches assumed here.
    assert Ntot % B == 0, "equal-size, sorted batches assumed"
    N = Ntot // B

    C1 = W1.shape[0]
    H1 = W1.shape[1]
    H2 = W2.shape[1]
    C_out = W3.shape[1]
    assert C1 == C_in + 3

    tile_n = min(tile_n, N)
    assert N % tile_n == 0, "points per graph must be a multiple of tile_n"
    n_tiles = N // tile_n

    # torch.cat([x, pos], dim=1), laid out as (B, N, C_in+3) for per-graph tiling.
    feat = jnp.concatenate([x, pos], axis=1).reshape(B, N, C1)

    pooled = pl.pallas_call(
        _global_sa_kernel,
        out_shape=jax.ShapeDtypeStruct((B, 1, C_out), x.dtype),
        grid_spec=pltpu.PrefetchScalarGridSpec(
            num_scalar_prefetch=0,
            grid=(B, n_tiles),
            in_specs=[
                pl.BlockSpec((1, tile_n, C1), lambda b, t: (b, t, 0)),   # feat
                pl.BlockSpec((C1, H1), lambda b, t: (0, 0)),             # W1
                pl.BlockSpec((1, H1), lambda b, t: (0, 0)),              # b1
                pl.BlockSpec((H1, H2), lambda b, t: (0, 0)),             # W2
                pl.BlockSpec((1, H2), lambda b, t: (0, 0)),              # b2
                pl.BlockSpec((H2, C_out), lambda b, t: (0, 0)),          # W3
                pl.BlockSpec((1, C_out), lambda b, t: (0, 0)),           # b3
            ],
            out_specs=pl.BlockSpec((1, 1, C_out), lambda b, t: (b, 0, 0)),
            scratch_shapes=[pltpu.VMEM((1, C_out), jnp.float32)],
        ),
        compiler_params=pltpu.CompilerParams(
            dimension_semantics=("parallel", "arbitrary"),
            vmem_limit_bytes=32 * 1024 * 1024,
        ),
    )(feat, W1, b1, W2, b2, W3, b3)

    pooled = pooled.reshape(B, C_out)
    pos_out = jnp.zeros((B, 3), dtype=pos.dtype)
    batch_out = jnp.arange(B, dtype=jnp.int32)
    return pooled, pos_out, batch_out


def global_sa_ref(x, pos, batch, W1, b1, W2, b2, W3, b3):
    """Pure-JAX reference matching the PyTorch forward (nn = Lin+ReLU x3)."""
    B = int(batch[-1]) + 1
    Ntot = x.shape[0]
    N = Ntot // B
    feat = jnp.concatenate([x, pos], axis=1)
    h = jax.nn.relu(feat @ W1 + b1)
    h = jax.nn.relu(h @ W2 + b2)
    h = jax.nn.relu(h @ W3 + b3)
    pooled = jnp.max(h.reshape(B, N, -1), axis=1)   # global_max_pool(h, batch)
    pos_out = jnp.zeros((B, 3), dtype=pos.dtype)
    batch_out = jnp.arange(B, dtype=jnp.int32)
    return pooled, pos_out, batch_out


if __name__ == "__main__":
    B, N, C_in = 2, 128, 29          # cat([x, pos]) -> 32 channels (lane-friendly)
    H1, H2, C_out = 64, 128, 256     # C_out multiple of 128 -> lane-dense output store

    key = jax.random.PRNGKey(0)
    kx, kp, k1, k2, k3, k4, k5, k6 = jax.random.split(key, 8)

    x = jax.random.normal(kx, (B * N, C_in), dtype=jnp.float32)
    pos = jax.random.normal(kp, (B * N, 3), dtype=jnp.float32)
    batch = jnp.repeat(jnp.arange(B, dtype=jnp.int32), N)

    # Deterministic parameter init (Linear weights stored as (in, out)).
    W1 = jax.random.normal(k1, (C_in + 3, H1), dtype=jnp.float32) * 0.1
    b1 = jax.random.normal(k2, (1, H1), dtype=jnp.float32) * 0.1
    W2 = jax.random.normal(k3, (H1, H2), dtype=jnp.float32) * 0.1
    b2 = jax.random.normal(k4, (1, H2), dtype=jnp.float32) * 0.1
    W3 = jax.random.normal(k5, (H2, C_out), dtype=jnp.float32) * 0.1
    b3 = jax.random.normal(k6, (1, C_out), dtype=jnp.float32) * 0.1

    out_x, out_pos, out_batch = global_sa_module(
        x, pos, batch, W1, b1, W2, b2, W3, b3, tile_n=64)
    out_x = jax.block_until_ready(out_x)

    ref_x, ref_pos, ref_batch = global_sa_ref(x, pos, batch, W1, b1, W2, b2, W3, b3)

    assert out_x.shape == (B, C_out)
    assert out_pos.shape == (B, 3)
    assert out_batch.shape == (B,)
    assert jnp.allclose(out_x, ref_x, atol=1e-3, rtol=1e-3), "pooled features mismatch vs reference"
    assert jnp.allclose(out_pos, ref_pos)
    assert bool(jnp.all(out_batch == ref_batch))

    print("KERNEL_OK")
</pallas_src>

<mosaic_0001>
module attributes {stable_mosaic.version = 11 : i64} {
  func.func @_global_sa_kernel(%arg0: i32, %arg1: i32, %arg2: memref<1x64x32xf32, #tpu.memory_space<vmem>>, %arg3: memref<32x64xf32, #tpu.memory_space<vmem>>, %arg4: memref<1x64xf32, #tpu.memory_space<vmem>>, %arg5: memref<64x128xf32, #tpu.memory_space<vmem>>, %arg6: memref<1x128xf32, #tpu.memory_space<vmem>>, %arg7: memref<128x256xf32, #tpu.memory_space<vmem>>, %arg8: memref<1x256xf32, #tpu.memory_space<vmem>>, %arg9: memref<1x1x256xf32, #tpu.memory_space<vmem>>, %arg10: memref<1x256xf32, #tpu.memory_space<vmem>>) attributes {dimension_semantics = [#tpu.dimension_semantics<parallel>, #tpu.dimension_semantics<arbitrary>], iteration_bounds = array<i64: 2, 2>, scalar_prefetch = 0 : i64, scratch_operands = 1 : i64, tpu.core_type = #tpu.core_type<tc>, window_params = [{transform_indices = @transform_0, window_bounds = array<i64: 1, 64, 32>}, {pipeline_mode = #tpu.pipeline_mode<synchronous>, transform_indices = @transform_1, window_bounds = array<i64: 32, 64>}, {pipeline_mode = #tpu.pipeline_mode<synchronous>, transform_indices = @transform_2, window_bounds = array<i64: 1, 64>}, {pipeline_mode = #tpu.pipeline_mode<synchronous>, transform_indices = @transform_3, window_bounds = array<i64: 64, 128>}, {pipeline_mode = #tpu.pipeline_mode<synchronous>, transform_indices = @transform_4, window_bounds = array<i64: 1, 128>}, {pipeline_mode = #tpu.pipeline_mode<synchronous>, transform_indices = @transform_5, window_bounds = array<i64: 128, 256>}, {pipeline_mode = #tpu.pipeline_mode<synchronous>, transform_indices = @transform_6, window_bounds = array<i64: 1, 256>}, {transform_indices = @transform_7, window_bounds = array<i64: 1, 1, 256>}]} {
    %c0 = arith.constant 0 : index
    %c0_0 = arith.constant 0 : index
    %c0_1 = arith.constant 0 : index
    %0 = vector.load %arg2[%c0, %c0_0, %c0_1] : memref<1x64x32xf32, #tpu.memory_space<vmem>>, vector<1x64x32xf32>
    %1 = vector.shape_cast %0 : vector<1x64x32xf32> to vector<64x32xf32>
    %c0_2 = arith.constant 0 : index
    %c0_3 = arith.constant 0 : index
    %2 = vector.load %arg3[%c0_2, %c0_3] : memref<32x64xf32, #tpu.memory_space<vmem>>, vector<32x64xf32>
    %cst = arith.constant dense<0.000000e+00> : vector<64x64xf32>
    %3 = tpu.matmul %1, %2, %cst {dimension_numbers = #tpu.dot_dimension_numbers<[1], [0], [0], [1], [0, 0, 1, 1], [], []>} : vector<64x32xf32>, vector<32x64xf32>, vector<64x64xf32> -> vector<64x64xf32>
    %c0_4 = arith.constant 0 : index
    %c0_5 = arith.constant 0 : index
    %4 = vector.load %arg4[%c0_4, %c0_5] : memref<1x64xf32, #tpu.memory_space<vmem>>, vector<1x64xf32>
    %5 = vector.broadcast %4 : vector<1x64xf32> to vector<64x64xf32>
    %6 = arith.addf %3, %5 : vector<64x64xf32>
    %cst_6 = arith.constant 0.000000e+00 : f32
    %7 = vector.broadcast %cst_6 : f32 to vector<64x64xf32>
    %8 = arith.maximumf %6, %7 : vector<64x64xf32>
    %c0_7 = arith.constant 0 : index
    %c0_8 = arith.constant 0 : index
    %9 = vector.load %arg5[%c0_7, %c0_8] : memref<64x128xf32, #tpu.memory_space<vmem>>, vector<64x128xf32>
    %cst_9 = arith.constant dense<0.000000e+00> : vector<64x128xf32>
    %10 = tpu.matmul %8, %9, %cst_9 {dimension_numbers = #tpu.dot_dimension_numbers<[1], [0], [0], [1], [0, 0, 1, 1], [], []>} : vector<64x64xf32>, vector<64x128xf32>, vector<64x128xf32> -> vector<64x128xf32>
    %c0_10 = arith.constant 0 : index
    %c0_11 = arith.constant 0 : index
    %11 = vector.load %arg6[%c0_10, %c0_11] : memref<1x128xf32, #tpu.memory_space<vmem>>, vector<1x128xf32>
    %12 = vector.broadcast %11 : vector<1x128xf32> to vector<64x128xf32>
    %13 = arith.addf %10, %12 : vector<64x128xf32>
    %cst_12 = arith.constant 0.000000e+00 : f32
    %14 = vector.broadcast %cst_12 : f32 to vector<64x128xf32>
    %15 = arith.maximumf %13, %14 : vector<64x128xf32>
    %c0_13 = arith.constant 0 : index
    %c0_14 = arith.constant 0 : index
    %16 = vector.load %arg7[%c0_13, %c0_14] : memref<128x256xf32, #tpu.memory_space<vmem>>, vector<128x256xf32>
    %cst_15 = arith.constant dense<0.000000e+00> : vector<64x256xf32>
    %17 = tpu.matmul %15, %16, %cst_15 {dimension_numbers = #tpu.dot_dimension_numbers<[1], [0], [0], [1], [0, 0, 1, 1], [], []>} : vector<64x128xf32>, vector<128x256xf32>, vector<64x256xf32> -> vector<64x256xf32>
    %c0_16 = arith.constant 0 : index
    %c0_17 = arith.constant 0 : index
    %18 = vector.load %arg8[%c0_16, %c0_17] : memref<1x256xf32, #tpu.memory_space<vmem>>, vector<1x256xf32>
    %19 = vector.broadcast %18 : vector<1x256xf32> to vector<64x256xf32>
    %20 = arith.addf %17, %19 : vector<64x256xf32>
    %cst_18 = arith.constant 0.000000e+00 : f32
    %21 = vector.broadcast %cst_18 : f32 to vector<64x256xf32>
    %22 = arith.maximumf %20, %21 : vector<64x256xf32>
    %cst_19 = arith.constant dense<0xFF800000> : vector<256xf32>
    %23 = vector.multi_reduction <maximumf>, %22, %cst_19 [0] : vector<64x256xf32> to vector<256xf32>
    %24 = vector.shape_cast %23 : vector<256xf32> to vector<1x256xf32>
    %c0_i32 = arith.constant 0 : i32
    %25 = arith.cmpi eq, %arg1, %c0_i32 : i32
    %26 = arith.extui %25 : i1 to i32
    %c0_i32_20 = arith.constant 0 : i32
    %27 = arith.cmpi ne, %26, %c0_i32_20 : i32
    scf.if %27 {
      %cst_26 = arith.constant 0xFF800000 : f32
      %34 = vector.broadcast %cst_26 : f32 to vector<1x256xf32>
      %c0_27 = arith.constant 0 : index
      %c0_28 = arith.constant 0 : index
      %35 = vector.load %arg10[%c0_27, %c0_28] : memref<1x256xf32, #tpu.memory_space<vmem>>, vector<1x256xf32>
      tpu.vector_store %arg10[%c0_27, %c0_28], %34 {strides = array<i32>} : memref<1x256xf32, #tpu.memory_space<vmem>>, vector<1x256xf32>,
    } else {
    }
    %c0_21 = arith.constant 0 : index
    %c0_22 = arith.constant 0 : index
    %28 = vector.load %arg10[%c0_21, %c0_22] : memref<1x256xf32, #tpu.memory_space<vmem>>, vector<1x256xf32>
    %29 = arith.maximumf %28, %24 : vector<1x256xf32>
    %c0_23 = arith.constant 0 : index
    %c0_24 = arith.constant 0 : index
    %30 = vector.load %arg10[%c0_23, %c0_24] : memref<1x256xf32, #tpu.memory_space<vmem>>, vector<1x256xf32>
    tpu.vector_store %arg10[%c0_23, %c0_24], %29 {strides = array<i32>} : memref<1x256xf32, #tpu.memory_space<vmem>>, vector<1x256xf32>,
    %c1_i32 = arith.constant 1 : i32
    %31 = arith.cmpi eq, %arg1, %c1_i32 : i32
    %32 = arith.extui %31 : i1 to i32
    %c0_i32_25 = arith.constant 0 : i32
    %33 = arith.cmpi ne, %32, %c0_i32_25 : i32
    scf.if %33 {
      %c0_26 = arith.constant 0 : index
      %c0_27 = arith.constant 0 : index
      %34 = vector.load %arg10[%c0_26, %c0_27] : memref<1x256xf32, #tpu.memory_space<vmem>>, vector<1x256xf32>
      %c0_28 = arith.constant 0 : index
      %c0_29 = arith.constant 0 : index
      %c0_30 = arith.constant 0 : index
      %35 = vector.load %arg9[%c0_28, %c0_29, %c0_30] : memref<1x1x256xf32, #tpu.memory_space<vmem>>, vector<1x1x256xf32>
      %36 = vector.shape_cast %35 : vector<1x1x256xf32> to vector<1x256xf32>
      %37 = vector.shape_cast %34 : vector<1x256xf32> to vector<1x1x256xf32>
      tpu.vector_store %arg9[%c0_28, %c0_29, %c0_30], %37 {strides = array<i32>} : memref<1x1x256xf32, #tpu.memory_space<vmem>>, vector<1x1x256xf32>,
    } else {
    }
    return
  }
  func.func @transform_0(%arg0: i32, %arg1: i32) -> (i32, i32, i32) {
    %c0_i32 = arith.constant 0 : i32
    %c0_i32_0 = arith.constant 0 : i32
    return %arg0, %arg1, %c0_i32 : i32, i32, i32
  }
  func.func @transform_1(%arg0: i32, %arg1: i32) -> (i32, i32) {
    %c0_i32 = arith.constant 0 : i32
    %c0_i32_0 = arith.constant 0 : i32
    %c0_i32_1 = arith.constant 0 : i32
    return %c0_i32, %c0_i32_0 : i32, i32
  }
  func.func @transform_2(%arg0: i32, %arg1: i32) -> (i32, i32) {
    %c0_i32 = arith.constant 0 : i32
    %c0_i32_0 = arith.constant 0 : i32
    %c0_i32_1 = arith.constant 0 : i32
    return %c0_i32, %c0_i32_0 : i32, i32
  }
  func.func @transform_3(%arg0: i32, %arg1: i32) -> (i32, i32) {
    %c0_i32 = arith.constant 0 : i32
    %c0_i32_0 = arith.constant 0 : i32
    %c0_i32_1 = arith.constant 0 : i32
    return %c0_i32, %c0_i32_0 : i32, i32
  }
  func.func @transform_4(%arg0: i32, %arg1: i32) -> (i32, i32) {
    %c0_i32 = arith.constant 0 : i32
    %c0_i32_0 = arith.constant 0 : i32
    %c0_i32_1 = arith.constant 0 : i32
    return %c0_i32, %c0_i32_0 : i32, i32
  }
  func.func @transform_5(%arg0: i32, %arg1: i32) -> (i32, i32) {
    %c0_i32 = arith.constant 0 : i32
    %c0_i32_0 = arith.constant 0 : i32
    %c0_i32_1 = arith.constant 0 : i32
    return %c0_i32, %c0_i32_0 : i32, i32
  }
  func.func @transform_6(%arg0: i32, %arg1: i32) -> (i32, i32) {
    %c0_i32 = arith.constant 0 : i32
    %c0_i32_0 = arith.constant 0 : i32
    %c0_i32_1 = arith.constant 0 : i32
    return %c0_i32, %c0_i32_0 : i32, i32
  }
  func.func @transform_7(%arg0: i32, %arg1: i32) -> (i32, i32, i32) {
    %c0_i32 = arith.constant 0 : i32
    %c0_i32_0 = arith.constant 0 : i32
    %c0_i32_1 = arith.constant 0 : i32
    return %arg0, %c0_i32, %c0_i32_0 : i32, i32, i32
  }
}

</mosaic_0001>

<llo_original>
// kernel: tpu_custom_call.1
$region0: #{tpu_custom_call.1}
  #allocation0 [shape = 'u32[]', space=smem, size = 0x4, offset = 0x4, fixed_abs, tag = 'smem constant byte address 0x4 - core index']
  #allocation1 [shape = 'u32[144,128]{1,0:T(1,128)}', space=vmem, size = 0x12000, scoped, tag = 'internal scratch']
  #allocation2 [shape = 'f32[1,256]{1,0:T(1,128)}', space=vmem, size = 0x400, scoped, tag = 'scratch operand']
  %s0 = inlined_call_operand.vmem [shape: f32[2,128,32], index: 0, kind: input, shape index: {}]
  %s1 = inlined_call_operand.hbm [shape: f32[32,64], index: 1, kind: input, shape index: {}]
  %s2 = inlined_call_operand.vmem [shape: f32[1,64], index: 2, kind: input, shape index: {}]
  %s3 = inlined_call_operand.vmem [shape: f32[64,128], index: 3, kind: input, shape index: {}]
  %s4 = inlined_call_operand.vmem [shape: f32[1,128], index: 4, kind: input, shape index: {}]
  %s5 = inlined_call_operand.vmem [shape: f32[128,256], index: 5, kind: input, shape index: {}]
  %s6 = inlined_call_operand.vmem [shape: f32[1,256], index: 6, kind: input, shape index: {}]
  %s7 = inlined_call_operand.hbm [shape: f32[2,1,256], index: 7, kind: output, shape index: {}]
  %s8 = sld [smem:[#allocation0]]
  $region73: #{tpu_custom_call.1} parent=0
    _
  %s10 = ssub.s32 1, %s8
  %s11 = scalar_select 0, %s10, %s8
  $region1: #{tpu_custom_call.1} parent=0
    #allocation3 [shape = 'u8[16384]{0}', space=vmem, size = 0x4000, scoped, tag = 'input window, operand 1, single buffered']
    #allocation4 [shape = 's32[2]{0}', space=sflag, size = 0x8, scoped, tag = 'scoped memory for tpu_custom_call.1']
    #allocation5 [shape = 's32[2]{0}', space=sflag, size = 0x8, scoped, tag = 'scoped memory for tpu_custom_call.1']
    #allocation6 [shape = 'u8[2048]{0}', space=vmem, size = 0x800, scoped, tag = 'output window, operand 0']
    %12 = vsyncpa [#allocation4], 0
    %13 = vsyncpa [#allocation5], 0
    %s14 = scalar_lea.sflag [#allocation5], 1
    %15 = vsyncpa %s14, 0
    loop: start=0, step=1, limit=6
    $region2: #{tpu_custom_call.1} parent=1 // loop_pre_header
      _
    $region3: #{tpu_custom_call.1} parent=1 // loop_header
      %s17 = sphi 0, %s21
      %p18 = scmp.ge.s32.totalorder %s17, 6
      %s24 = sphi 0, %s36
      %s25 = sphi 0, %s32
      %s26 = sphi 0, %s24
      %s27 = sphi 0, %s25
      %s28 = sphi 0, %s26
      %s29 = sphi 0, %s27
      %s41 = sphi 0, %s43
      %s44 = sphi 0, %s41
      %s45 = sphi 0, %s44
      %s61 = sphi 0, %s45
      %s65 = sphi 0, %s65
      %s67 = sphi 0, %s65
      %s68 = sphi 0, %s67
      %s82 = sphi 0, %s68
      %s86 = sphi 0, %s86
      %s88 = sphi 0, %s86
      %s89 = sphi 0, %s88
      %s103 = sphi 0, %s89
      %s107 = sphi 0, %s107
      %s109 = sphi 0, %s107
      %s110 = sphi 0, %s109
      %s124 = sphi 0, %s110
      %s128 = sphi 0, %s128
      %s130 = sphi 0, %s128
      %s131 = sphi 0, %s130
      %s145 = sphi 0, %s131
      %s149 = sphi 0, %s149
      %s151 = sphi 0, %s149
      %s152 = sphi 0, %s151
      %s166 = sphi 0, %s152
      %s170 = sphi 0, %s170
      %s172 = sphi 0, %s170
      %s173 = sphi 0, %s172
      %s187 = sphi 0, %s173
      %s193 = sphi 0, %s195
      %s196 = sphi 0, %s193
      %s197 = sphi 0, %s196
      %s213 = sphi 0, %s197
    $region4: #{tpu_custom_call.1} parent=1 // loop_header_branch
      %20 = sbr.rel (%p18) target = $region8
    $region5: #{tpu_custom_call.1} parent=1 // loop_body
      %s22 = ssub.s32 %s17, 1
      %s23 = ssub.s32 %s17, 2
      %s30 = sadd.s32 1, %s25
      %p31 = scmp.ge.s32.totalorder %s30, 2
      %s32 = scalar_select %p31, 0, %s30
      %s33 = sadd.s32 1, %s24
      %s34 = scalar_select %p31, %s33, %s24
      %p35 = scmp.ge.s32.totalorder %s34, 2
      %s36 = scalar_select %p35, 0, %s34
      %s37 = ssub.s32 %s24, %s36
      %s38 = ssub.s32 %s25, %s32
      %s39 = sor.u32 %s37, %s38
      %p40 = scmp.eq.s32.totalorder %s39, 0
      %s42 = sadd.s32 %s41, 1
      %s43 = scalar_select %p40, %s41, %s42
      %p46 = pneg %p40
      %p47 = scmp.eq.s32.totalorder %s17, 3
      %p48 = por %p46, %p47
      %p49 = scmp.ne.s32.totalorder %s41, %s44
      %p50 = scmp.eq.s32.totalorder %s17, 0
      %p51 = por %p49, %p50
      %p52 = scmp.ne.s32.totalorder %s41, %s44
      %p53 = scmp.eq.s32.totalorder %s22, 3
      %p54 = por %p52, %p53
      %p55 = scmp.ne.s32.totalorder %s44, %s45
      %p56 = scmp.eq.s32.totalorder %s22, 0
      %p57 = por %p55, %p56
      %p58 = scmp.ne.s32.totalorder %s44, %s45
      %p59 = scmp.eq.s32.totalorder %s23, 3
      %p60 = por %p58, %p59
      %p62 = scmp.ne.s32.totalorder %s45, %s61
      %p63 = scmp.eq.s32.totalorder %s23, 0
      %p64 = por %p62, %p63
      %s66 = sadd.s32 %s65, 1
      %p69 = scmp.eq.s32.totalorder %s17, 3
      %p70 = scmp.ne.s32.totalorder %s65, %s67
      %p71 = scmp.eq.s32.totalorder %s17, 0
      %p72 = por %p70, %p71
      %p73 = scmp.ne.s32.totalorder %s65, %s67
      %p74 = scmp.eq.s32.totalorder %s22, 3
      %p75 = por %p73, %p74
      %p76 = scmp.ne.s32.totalorder %s67, %s68
      %p77 = scmp.eq.s32.totalorder %s22, 0
      %p78 = por %p76, %p77
      %p79 = scmp.ne.s32.totalorder %s67, %s68
      %p80 = scmp.eq.s32.totalorder %s23, 3
      %p81 = por %p79, %p80
      %p83 = scmp.ne.s32.totalorder %s68, %s82
      %p84 = scmp.eq.s32.totalorder %s23, 0
      %p85 = por %p83, %p84
      %s87 = sadd.s32 %s86, 1
      %p90 = scmp.eq.s32.totalorder %s17, 3
      %p91 = scmp.ne.s32.totalorder %s86, %s88
      %p92 = scmp.eq.s32.totalorder %s17, 0
      %p93 = por %p91, %p92
      %p94 = scmp.ne.s32.totalorder %s86, %s88
      %p95 = scmp.eq.s32.totalorder %s22, 3
      %p96 = por %p94, %p95
      %p97 = scmp.ne.s32.totalorder %s88, %s89
      %p98 = scmp.eq.s32.totalorder %s22, 0
      %p99 = por %p97, %p98
      %p100 = scmp.ne.s32.totalorder %s88, %s89
      %p101 = scmp.eq.s32.totalorder %s23, 3
      %p102 = por %p100, %p101
      %p104 = scmp.ne.s32.totalorder %s89, %s103
      %p105 = scmp.eq.s32.totalorder %s23, 0
      %p106 = por %p104, %p105
      %s108 = sadd.s32 %s107, 1
      %p111 = scmp.eq.s32.totalorder %s17, 3
      %p112 = scmp.ne.s32.totalorder %s107, %s109
      %p113 = scmp.eq.s32.totalorder %s17, 0
      %p114 = por %p112, %p113
      %p115 = scmp.ne.s32.totalorder %s107, %s109
      %p116 = scmp.eq.s32.totalorder %s22, 3
      %p117 = por %p115, %p116
      %p118 = scmp.ne.s32.totalorder %s109, %s110
      %p119 = scmp.eq.s32.totalorder %s22, 0
      %p120 = por %p118, %p119
      %p121 = scmp.ne.s32.totalorder %s109, %s110
      %p122 = scmp.eq.s32.totalorder %s23, 3
      %p123 = por %p121, %p122
      %p125 = scmp.ne.s32.totalorder %s110, %s124
      %p126 = scmp.eq.s32.totalorder %s23, 0
      %p127 = por %p125, %p126
      %s129 = sadd.s32 %s128, 1
      %p132 = scmp.eq.s32.totalorder %s17, 3
      %p133 = scmp.ne.s32.totalorder %s128, %s130
      %p134 = scmp.eq.s32.totalorder %s17, 0
      %p135 = por %p133, %p134
      %p136 = scmp.ne.s32.totalorder %s128, %s130
      %p137 = scmp.eq.s32.totalorder %s22, 3
      %p138 = por %p136, %p137
      %p139 = scmp.ne.s32.totalorder %s130, %s131
      %p140 = scmp.eq.s32.totalorder %s22, 0
      %p141 = por %p139, %p140
      %p142 = scmp.ne.s32.totalorder %s130, %s131
      %p143 = scmp.eq.s32.totalorder %s23, 3
      %p144 = por %p142, %p143
      %p146 = scmp.ne.s32.totalorder %s131, %s145
      %p147 = scmp.eq.s32.totalorder %s23, 0
      %p148 = por %p146, %p147
      %s150 = sadd.s32 %s149, 1
      %p153 = scmp.eq.s32.totalorder %s17, 3
      %p154 = scmp.ne.s32.totalorder %s149, %s151
      %p155 = scmp.eq.s32.totalorder %s17, 0
      %p156 = por %p154, %p155
      %p157 = scmp.ne.s32.totalorder %s149, %s151
      %p158 = scmp.eq.s32.totalorder %s22, 3
      %p159 = por %p157, %p158
      %p160 = scmp.ne.s32.totalorder %s151, %s152
      %p161 = scmp.eq.s32.totalorder %s22, 0
      %p162 = por %p160, %p161
      %p163 = scmp.ne.s32.totalorder %s151, %s152
      %p164 = scmp.eq.s32.totalorder %s23, 3
      %p165 = por %p163, %p164
      %p167 = scmp.ne.s32.totalorder %s152, %s166
      %p168 = scmp.eq.s32.totalorder %s23, 0
      %p169 = por %p167, %p168
      %s171 = sadd.s32 %s170, 1
      %p174 = scmp.eq.s32.totalorder %s17, 3
      %p175 = scmp.ne.s32.totalorder %s170, %s172
      %p176 = scmp.eq.s32.totalorder %s17, 0
      %p177 = por %p175, %p176
      %p178 = scmp.ne.s32.totalorder %s170, %s172
      %p179 = scmp.eq.s32.totalorder %s22, 3
      %p180 = por %p178, %p179
      %p181 = scmp.ne.s32.totalorder %s172, %s173
      %p182 = scmp.eq.s32.totalorder %s22, 0
      %p183 = por %p181, %p182
      %p184 = scmp.ne.s32.totalorder %s172, %s173
      %p185 = scmp.eq.s32.totalorder %s23, 3
      %p186 = por %p184, %p185
      %p188 = scmp.ne.s32.totalorder %s173, %s187
      %p189 = scmp.eq.s32.totalorder %s23, 0
      %p190 = por %p188, %p189
      %s191 = ssub.s32 %s24, %s36
      %p192 = scmp.eq.s32.totalorder %s191, 0
      %s194 = sadd.s32 %s193, 1
      %s195 = scalar_select %p192, %s193, %s194
      %p198 = pneg %p192
      %p199 = scmp.eq.s32.totalorder %s17, 3
      %p200 = por %p198, %p199
      %p201 = scmp.ne.s32.totalorder %s193, %s196
      %p202 = scmp.eq.s32.totalorder %s17, 0
      %p203 = por %p201, %p202
      %p204 = scmp.ne.s32.totalorder %s193, %s196
      %p205 = scmp.eq.s32.totalorder %s22, 3
      %p206 = por %p204, %p205
      %p207 = scmp.ne.s32.totalorder %s196, %s197
      %p208 = scmp.eq.s32.totalorder %s22, 0
      %p209 = por %p207, %p208
      %p210 = scmp.ne.s32.totalorder %s196, %s197
      %p211 = scmp.eq.s32.totalorder %s23, 3
      %p212 = por %p210, %p211
      %p214 = scmp.ne.s32.totalorder %s197, %s213
      %p215 = scmp.eq.s32.totalorder %s23, 0
      %p216 = por %p214, %p215
      %p217 = scmp.le.s32.totalorder 1, %s17
      %p218 = scmp.lt.s32.totalorder %s17, 5
      %p219 = pnand %p217, %p218
      %p220 = pneg %p219
      // Predicated region
      $region9: #{tpu_custom_call.1} parent=5 // pred_check
        _
      $region10: #{tpu_custom_call.1} parent=5 // pred_check_branch
        %222 = sbr.rel (%p219) target = $region12
      $region11: #{tpu_custom_call.1} parent=5 // pred_region
        %s223 = ssub.s32 %s17, 1
        // Predicated region
        $region13: #{tpu_custom_call.1} parent=11 // pred_check
          %p224 = pneg %p78
        $region14: #{tpu_custom_call.1} parent=11 // pred_check_branch
          %226 = sbr.rel (%p224) target = $region16
        $region15: #{tpu_custom_call.1} parent=11 // pred_region
          %s228 = ssub.s32 512, 512
          %229 = vsyncadd [#allocation4], %s228
          %s230 = sshll.u32 [#allocation3], 4
          %s231 = int_to_ptr.vmem [resolvable:$true] %s230
          %236 = dma.hbm_to_vmem [thread:$0]  %s1, 512, %s231, [#allocation4], 128, 128, 8
        $region16: #{tpu_custom_call.1} parent=11 // pred_fallthru
          _
        // Predicated region
        $region17: #{tpu_custom_call.1} parent=11 // pred_check
          %p237 = pneg %p99
        $region18: #{tpu_custom_call.1} parent=11 // pred_check_branch
          %239 = sbr.rel (%p237) target = $region20
        $region19: #{tpu_custom_call.1} parent=11 // pred_region
          _
        $region20: #{tpu_custom_call.1} parent=11 // pred_fallthru
          _
        // Predicated region
        $region21: #{tpu_custom_call.1} parent=11 // pred_check
          %p240 = pneg %p120
        $region22: #{tpu_custom_call.1} parent=11 // pred_check_branch
          %242 = sbr.rel (%p240) target = $region24
        $region23: #{tpu_custom_call.1} parent=11 // pred_region
          _
        $region24: #{tpu_custom_call.1} parent=11 // pred_fallthru
          _
        // Predicated region
        $region25: #{tpu_custom_call.1} parent=11 // pred_check
          %p243 = pneg %p141
        $region26: #{tpu_custom_call.1} parent=11 // pred_check_branch
          %245 = sbr.rel (%p243) target = $region28
        $region27: #{tpu_custom_call.1} parent=11 // pred_region
          _
        $region28: #{tpu_custom_call.1} parent=11 // pred_fallthru
          _
        // Predicated region
        $region29: #{tpu_custom_call.1} parent=11 // pred_check
          %p246 = pneg %p162
        $region30: #{tpu_custom_call.1} parent=11 // pred_check_branch
          %248 = sbr.rel (%p246) target = $region32
        $region31: #{tpu_custom_call.1} parent=11 // pred_region
          _
        $region32: #{tpu_custom_call.1} parent=11 // pred_fallthru
          _
        // Predicated region
        $region33: #{tpu_custom_call.1} parent=11 // pred_check
          %p249 = pneg %p183
        $region34: #{tpu_custom_call.1} parent=11 // pred_check_branch
          %251 = sbr.rel (%p249) target = $region36
        $region35: #{tpu_custom_call.1} parent=11 // pred_region
          _
        $region36: #{tpu_custom_call.1} parent=11 // pred_fallthru
          _
      $region12: #{tpu_custom_call.1} parent=5 // pred_fallthru
        _
      %p252 = scmp.lt.s32.totalorder %s17, 4
      // Predicated region
      $region37: #{tpu_custom_call.1} parent=5 // pred_check
        %p253 = pneg %p252
      $region38: #{tpu_custom_call.1} parent=5 // pred_check_branch
        %255 = sbr.rel (%p253) target = $region40
      $region39: #{tpu_custom_call.1} parent=5 // pred_region
        // Predicated region
        $region41: #{tpu_custom_call.1} parent=39 // pred_check
          %p256 = pneg %p51
        $region42: #{tpu_custom_call.1} parent=39 // pred_check_branch
          %258 = sbr.rel (%p256) target = $region44
        $region43: #{tpu_custom_call.1} parent=39 // pred_region
          %s259 = smul.u32 8, %s25
          %p260 = scmp.lt.s32.totalorder %s24, 1
          %s261 = scalar_select %p260, %s24, 1
          %p262 = scmp.lt.s32.totalorder %s259, 15
          %s263 = scalar_select %p262, %s259, 15
          %s264 = smul.addr %s261, 16
          %s265 = sadd.s32 %s263, %s264
          %s266 = smul.addr %s265, 8
          %s267 = scalar_lea.vmem %s0, %s266
          %s268 = smul.u32 8, %s25
        $region44: #{tpu_custom_call.1} parent=39 // pred_fallthru
          _
      $region40: #{tpu_custom_call.1} parent=5 // pred_fallthru
        _
      %p269 = scmp.le.s32.totalorder 1, %s17
      %p270 = scmp.lt.s32.totalorder %s17, 5
      %p271 = pnand %p269, %p270
      %p272 = pneg %p271
      // Predicated region
      $region45: #{tpu_custom_call.1} parent=5 // pred_check
        _
      $region46: #{tpu_custom_call.1} parent=5 // pred_check_branch
        %274 = sbr.rel (%p271) target = $region48
      $region47: #{tpu_custom_call.1} parent=5 // pred_region
        %s275 = ssub.s32 %s17, 1
        // Predicated region
        $region49: #{tpu_custom_call.1} parent=47 // pred_check
          %p276 = pneg %p78
        $region50: #{tpu_custom_call.1} parent=47 // pred_check_branch
          %278 = sbr.rel (%p276) target = $region52
        $region51: #{tpu_custom_call.1} parent=47 // pred_region
          %279 = dma.done [#allocation4], 512
        $region52: #{tpu_custom_call.1} parent=47 // pred_fallthru
          _
        %s280 = smul.u32 8, %s27
        %p281 = scmp.lt.s32.totalorder %s26, 1
        %s282 = scalar_select %p281, %s26, 1
        %p283 = scmp.lt.s32.totalorder %s280, 15
        %s284 = scalar_select %p283, %s280, 15
        %s285 = smul.addr %s282, 16
        %s286 = sadd.s32 %s284, %s285
        %s287 = smul.addr %s286, 8
        %s288 = scalar_lea.vmem %s0, %s287
        %p289 = pneg %p57
        %p290 = pneg %p54
        %p291 = pneg %p78
        %p292 = pneg %p75
        %p293 = pneg %p99
        %p294 = pneg %p96
        %p295 = pneg %p120
        %p296 = pneg %p117
        %p297 = pneg %p141
        %p298 = pneg %p138
        %p299 = pneg %p162
        %p300 = pneg %p159
        %p301 = pneg %p183
        %p302 = pneg %p180
        %p303 = pneg %p209
        %p304 = pneg %p206
        %s305 = sand.u32 %s196, 1
        %s306 = scalar_lea.sflag [#allocation5], %s305
        %s307 = sand.u32 %s196, 1
        %s308 = smul.addr %s307, 2
        %s309 = scalar_lea.vmem [#allocation6], %s308
        %s310 = smul.u32 8, %s27
        %p311 = scmp.lt.s32.totalorder %s26, 1
        %s312 = scalar_select %p311, %s26, 1
        %p313 = scmp.lt.s32.totalorder %s310, 15
        %s314 = scalar_select %p313, %s310, 15
        %s315 = smul.addr %s312, 16
        %s316 = sadd.s32 %s314, %s315
        %s317 = smul.addr %s316, 8
        %s318 = scalar_lea.vmem %s0, %s317
        %s319 = smul.u32 8, %s27
        %v320 = vld [vmem:[%s318] sm:$0xff]
        %v321 = vld [vmem:[%s318 + $0x8] sm:$0xff]
        %v322 = vld [vmem:[%s318 + $0x10] sm:$0xff]
        %v323 = vld [vmem:[%s318 + $0x18] sm:$0xff]
        %v324 = vld [vmem:[%s318 + $0x20] sm:$0xff]
        %v325 = vld [vmem:[%s318 + $0x28] sm:$0xff]
        %v326 = vld [vmem:[%s318 + $0x30] sm:$0xff]
        %v327 = vld [vmem:[%s318 + $0x38] sm:$0xff]
        %v328 = vld [vmem:[#allocation3] sm:$0xff]
        %v329 = vld [vmem:[#allocation3 + $0x8] sm:$0xff]
        %v330 = vld [vmem:[#allocation3 + $0x10] sm:$0xff]
        %v331 = vld [vmem:[#allocation3 + $0x18] sm:$0xff]
        %v332 = vld [vmem:[%s2] sm:$0x1]
        %v334 = vlaneseq
        %v335 = vshrl.u32 %v334, 7
        %v336 = vsub.s32 0, %v335
        %v337 = vrot.slane %v332, %v336
        %vm339 = vcmask 261120
        %v341 = vsel %vm339, %v320, 0
        %v344 = vsel %vm339, %v321, 0
        %v347 = vsel %vm339, %v322, 0
        %v350 = vsel %vm339, %v323, 0
        %v353 = vsel %vm339, %v324, 0
        %v356 = vsel %vm339, %v325, 0
        %v359 = vsel %vm339, %v326, 0
        %v362 = vsel %vm339, %v327, 0
        %364 = vmatprep.subr.mxu0 0.0
        %365 = vmatpush1.msra.mxu0 %v328
        %366 = vmatprep.subr.mxu0 0.0
        %367 = vmatpush1.msra.mxu0 %v329
        %368 = vmatprep.subr.mxu0 0.0
        %369 = vmatpush1.msra.mxu0 %v330
        %370 = vmatprep.subr.mxu0 0.0
        %371 = vmatpush1.msra.mxu0 %v331
        %372 = vmatprep.subr.mxu0 0.0
        %373 = vmatpush1.msra.mxu0 0.0
        %374 = vmatprep.subr.mxu0 0.0
        %375 = vmatpush1.msra.mxu0 0.0
        %376 = vmatprep.subr.mxu0 0.0
        %377 = vmatpush1.msra.mxu0 0.0
        %378 = vmatprep.subr.mxu0 0.0
        %379 = vmatpush1.msra.mxu0 0.0
        %380 = vmatprep.subr.mxu0 0.0
        %381 = vmatpush1.msra.mxu0 0.0
        %382 = vmatprep.subr.mxu0 0.0
        %383 = vmatpush1.msra.mxu0 0.0
        %384 = vmatprep.subr.mxu0 0.0
        %385 = vmatpush1.msra.mxu0 0.0
        %386 = vmatprep.subr.mxu0 0.0
        %387 = vmatpush1.msra.mxu0 0.0
        %388 = vmatprep.subr.mxu0 0.0
        %389 = vmatpush1.msra.mxu0 0.0
        %390 = vmatprep.subr.mxu0 0.0
        %391 = vmatpush1.msra.mxu0 0.0
        %392 = vmatprep.subr.mxu0 0.0
        %393 = vmatpush1.msra.mxu0 0.0
        %394 = vmatprep.subr.mxu0 0.0
        %395 = vmatpush1.msra.mxu0 0.0
        %396 = vmatprep.subr.mxu0 0.0
        %397 = vmatpush1.msra.mxu0 0.0
        %398 = vmatprep.subr.mxu0 0.0
        %399 = vmatpush1.msra.mxu0 0.0
        %400 = vmatprep.subr.mxu0 0.0
        %401 = vmatpush1.msra.mxu0 0.0
        %402 = vmatprep.subr.mxu0 0.0
        %403 = vmatpush1.msra.mxu0 0.0
        %404 = vmatprep.subr.mxu0 0.0
        %405 = vmatpush1.msra.mxu0 0.0
        %406 = vmatprep.subr.mxu0 0.0
        %407 = vmatpush1.msra.mxu0 0.0
        %408 = vmatprep.subr.mxu0 0.0
        %409 = vmatpush1.msra.mxu0 0.0
        %410 = vmatprep.subr.mxu0 0.0
        %411 = vmatpush1.msra.mxu0 0.0
        %412 = vmatprep.subr.mxu0 0.0
        %413 = vmatpush1.msra.mxu0 0.0
        %414 = vmatprep.subr.mxu0 0.0
        %415 = vmatpush1.msra.mxu0 0.0
        %416 = vmatprep.subr.mxu0 0.0
        %417 = vmatpush1.msra.mxu0 0.0
        %418 = vmatprep.subr.mxu0 0.0
        %419 = vmatpush1.msra.mxu0 0.0
        %420 = vmatprep.subr.mxu0 0.0
        %421 = vmatpush1.msra.mxu0 0.0
        %422 = vmatprep.subr.mxu0 0.0
        %423 = vmatpush1.msra.mxu0 0.0
        %424 = vmatprep.subr.mxu0 0.0
        %425 = vmatpush1.msra.mxu0 0.0
        %426 = vmatprep.subr.mxu0 0.0
        %427 = vmatpush1.msra.mxu0 0.0
        %428 = vmatprep.mubr.f32.mxu0 0.0
        %429 = vmatmul.mubr.f32.gmra.mrb[0].mxu0 %v341
        %v430 = vpop.f32.mrb[0].mxu0
        %v431 = vadd.f32 %v337, %v430
        %v432 = vpop.f32.mrb[0].mxu0
        %433 = vmatprep.mubr.f32.mxu0 0.0
        %434 = vmatmul.mubr.f32.gmra.mrb[0].mxu0 %v344
        %v435 = vpop.f32.mrb[0].mxu0
        %v436 = vadd.f32 %v337, %v435
        %v437 = vpop.f32.mrb[0].mxu0
        %438 = vmatprep.mubr.f32.mxu0 0.0
        %439 = vmatmul.mubr.f32.gmra.mrb[0].mxu0 %v347
        %v440 = vpop.f32.mrb[0].mxu0
        %v441 = vadd.f32 %v337, %v440
        %v442 = vpop.f32.mrb[0].mxu0
        %443 = vmatprep.mubr.f32.mxu0 0.0
        %444 = vmatmul.mubr.f32.gmra.mrb[0].mxu0 %v350
        %v445 = vpop.f32.mrb[0].mxu0
        %v446 = vadd.f32 %v337, %v445
        %v447 = vpop.f32.mrb[0].mxu0
        %448 = vmatprep.mubr.f32.mxu0 0.0
        %449 = vmatmul.mubr.f32.gmra.mrb[0].mxu0 %v353
        %v450 = vpop.f32.mrb[0].mxu0
        %v451 = vadd.f32 %v337, %v450
        %v452 = vpop.f32.mrb[0].mxu0
        %453 = vmatprep.mubr.f32.mxu0 0.0
        %454 = vmatmul.mubr.f32.gmra.mrb[0].mxu0 %v356
        %v455 = vpop.f32.mrb[0].mxu0
        %v456 = vadd.f32 %v337, %v455
        %v457 = vpop.f32.mrb[0].mxu0
        %458 = vmatprep.mubr.f32.mxu0 0.0
        %459 = vmatmul.mubr.f32.gmra.mrb[0].mxu0 %v359
        %v460 = vpop.f32.mrb[0].mxu0
        %v461 = vadd.f32 %v337, %v460
        %v462 = vpop.f32.mrb[0].mxu0
        %463 = vmatprep.mubr.f32.mxu0 0.0
        %464 = vmatmul.mubr.f32.gmra.mrb[0].mxu0 %v362
        %v465 = vpop.f32.mrb[0].mxu0
        %v466 = vadd.f32 %v337, %v465
        %v467 = vpop.f32.mrb[0].mxu0
        %468 = vdwg.mxu0
        %v469 = vmax.f32 %v431, 0.0
        %v470 = vmax.f32 %v436, 0.0
        %v471 = vmax.f32 %v441, 0.0
        %v472 = vmax.f32 %v446, 0.0
        %v473 = vmax.f32 %v451, 0.0
        %v474 = vmax.f32 %v456, 0.0
        %v475 = vmax.f32 %v461, 0.0
        %v476 = vmax.f32 %v466, 0.0
        %v477 = vld [vmem:[%s3] sm:$0xff]
        %v478 = vld [vmem:[%s3 + $0x8] sm:$0xff]
        %v479 = vld [vmem:[%s3 + $0x10] sm:$0xff]
        %v480 = vld [vmem:[%s3 + $0x18] sm:$0xff]
        %v481 = vld [vmem:[%s3 + $0x20] sm:$0xff]
        %v482 = vld [vmem:[%s3 + $0x28] sm:$0xff]
        %v483 = vld [vmem:[%s3 + $0x30] sm:$0xff]
        %v484 = vld [vmem:[%s3 + $0x38] sm:$0xff]
        %v485 = vld [vmem:[%s4] sm:$0x1]
        %v487 = vlaneseq
        %v488 = vshrl.u32 %v487, 7
        %v489 = vsub.s32 0, %v488
        %v490 = vrot.slane %v485, %v489
        %vm492 = vcmask 523264
        %v494 = vsel %vm492, %v469, 0
        %v497 = vsel %vm492, %v470, 0
        %v500 = vsel %vm492, %v471, 0
        %v503 = vsel %vm492, %v472, 0
        %v506 = vsel %vm492, %v473, 0
        %v509 = vsel %vm492, %v474, 0
        %v512 = vsel %vm492, %v475, 0
        %v515 = vsel %vm492, %v476, 0
        %517 = vmatprep.subr.mxu0 0.0
        %518 = vmatpush1.msra.mxu0 %v477
        %519 = vmatprep.subr.mxu0 0.0
        %520 = vmatpush1.msra.mxu0 %v478
        %521 = vmatprep.subr.mxu0 0.0
        %522 = vmatpush1.msra.mxu0 %v479
        %523 = vmatprep.subr.mxu0 0.0
        %524 = vmatpush1.msra.mxu0 %v480
        %525 = vmatprep.subr.mxu0 0.0
        %526 = vmatpush1.msra.mxu0 %v481
        %527 = vmatprep.subr.mxu0 0.0
        %528 = vmatpush1.msra.mxu0 %v482
        %529 = vmatprep.subr.mxu0 0.0
        %530 = vmatpush1.msra.mxu0 %v483
        %531 = vmatprep.subr.mxu0 0.0
        %532 = vmatpush1.msra.mxu0 %v484
        %533 = vmatprep.subr.mxu0 0.0
        %534 = vmatpush1.msra.mxu0 0.0
        %535 = vmatprep.subr.mxu0 0.0
        %536 = vmatpush1.msra.mxu0 0.0
        %537 = vmatprep.subr.mxu0 0.0
        %538 = vmatpush1.msra.mxu0 0.0
        %539 = vmatprep.subr.mxu0 0.0
        %540 = vmatpush1.msra.mxu0 0.0
        %541 = vmatprep.subr.mxu0 0.0
        %542 = vmatpush1.msra.mxu0 0.0
        %543 = vmatprep.subr.mxu0 0.0
        %544 = vmatpush1.msra.mxu0 0.0
        %545 = vmatprep.subr.mxu0 0.0
        %546 = vmatpush1.msra.mxu0 0.0
        %547 = vmatprep.subr.mxu0 0.0
        %548 = vmatpush1.msra.mxu0 0.0
        %549 = vmatprep.subr.mxu0 0.0
        %550 = vmatpush1.msra.mxu0 0.0
        %551 = vmatprep.subr.mxu0 0.0
        %552 = vmatpush1.msra.mxu0 0.0
        %553 = vmatprep.subr.mxu0 0.0
        %554 = vmatpush1.msra.mxu0 0.0
        %555 = vmatprep.subr.mxu0 0.0
        %556 = vmatpush1.msra.mxu0 0.0
        %557 = vmatprep.subr.mxu0 0.0
        %558 = vmatpush1.msra.mxu0 0.0
        %559 = vmatprep.subr.mxu0 0.0
        %560 = vmatpush1.msra.mxu0 0.0
        %561 = vmatprep.subr.mxu0 0.0
        %562 = vmatpush1.msra.mxu0 0.0
        %563 = vmatprep.subr.mxu0 0.0
        %564 = vmatpush1.msra.mxu0 0.0
        %565 = vmatprep.subr.mxu0 0.0
        %566 = vmatpush1.msra.mxu0 0.0
        %567 = vmatprep.subr.mxu0 0.0
        %568 = vmatpush1.msra.mxu0 0.0
        %569 = vmatprep.subr.mxu0 0.0
        %570 = vmatpush1.msra.mxu0 0.0
        %571 = vmatprep.subr.mxu0 0.0
        %572 = vmatpush1.msra.mxu0 0.0
        %573 = vmatprep.subr.mxu0 0.0
        %574 = vmatpush1.msra.mxu0 0.0
        %575 = vmatprep.subr.mxu0 0.0
        %576 = vmatpush1.msra.mxu0 0.0
        %577 = vmatprep.subr.mxu0 0.0
        %578 = vmatpush1.msra.mxu0 0.0
        %579 = vmatprep.subr.mxu0 0.0
        %580 = vmatpush1.msra.mxu0 0.0
        %581 = vmatprep.mubr.f32.mxu0 0.0
        %582 = vmatmul.mubr.f32.gmra.mrb[0].mxu0 %v494
        %v583 = vpop.f32.mrb[0].mxu0
        %v584 = vadd.f32 %v490, %v583
        %v585 = vpop.f32.mrb[0].mxu0
        %586 = vmatprep.mubr.f32.mxu0 0.0
        %587 = vmatmul.mubr.f32.gmra.mrb[0].mxu0 %v497
        %v588 = vpop.f32.mrb[0].mxu0
        %v589 = vadd.f32 %v490, %v588
        %v590 = vpop.f32.mrb[0].mxu0
        %591 = vmatprep.mubr.f32.mxu0 0.0
        %592 = vmatmul.mubr.f32.gmra.mrb[0].mxu0 %v500
        %v593 = vpop.f32.mrb[0].mxu0
        %v594 = vadd.f32 %v490, %v593
        %v595 = vpop.f32.mrb[0].mxu0
        %596 = vmatprep.mubr.f32.mxu0 0.0
        %597 = vmatmul.mubr.f32.gmra.mrb[0].mxu0 %v503
        %v598 = vpop.f32.mrb[0].mxu0
        %v599 = vadd.f32 %v490, %v598
        %v600 = vpop.f32.mrb[0].mxu0
        %601 = vmatprep.mubr.f32.mxu0 0.0
        %602 = vmatmul.mubr.f32.gmra.mrb[0].mxu0 %v506
        %v603 = vpop.f32.mrb[0].mxu0
        %v604 = vadd.f32 %v490, %v603
        %v605 = vpop.f32.mrb[0].mxu0
        %606 = vmatprep.mubr.f32.mxu0 0.0
        %607 = vmatmul.mubr.f32.gmra.mrb[0].mxu0 %v509
        %v608 = vpop.f32.mrb[0].mxu0
        %v609 = vadd.f32 %v490, %v608
        %v610 = vpop.f32.mrb[0].mxu0
        %611 = vmatprep.mubr.f32.mxu0 0.0
        %612 = vmatmul.mubr.f32.gmra.mrb[0].mxu0 %v512
        %v613 = vpop.f32.mrb[0].mxu0
        %v614 = vadd.f32 %v490, %v613
        %v615 = vpop.f32.mrb[0].mxu0
        %616 = vmatprep.mubr.f32.mxu0 0.0
        %617 = vmatmul.mubr.f32.gmra.mrb[0].mxu0 %v515
        %v618 = vpop.f32.mrb[0].mxu0
        %v619 = vadd.f32 %v490, %v618
        %v620 = vpop.f32.mrb[0].mxu0
        %621 = vdwg.mxu0
        %v622 = vmax.f32 %v584, 0.0
        %v623 = vmax.f32 %v589, 0.0
        %v624 = vmax.f32 %v594, 0.0
        %v625 = vmax.f32 %v599, 0.0
        %v626 = vmax.f32 %v604, 0.0
        %v627 = vmax.f32 %v609, 0.0
        %v628 = vmax.f32 %v614, 0.0
        %v629 = vmax.f32 %v619, 0.0
        %v630 = vld [vmem:[%s5] sm:$0xff]
        %v631 = vld [vmem:[%s5 + $0x8] sm:$0xff]
        %v632 = vld [vmem:[%s5 + $0x10] sm:$0xff]
        %v633 = vld [vmem:[%s5 + $0x18] sm:$0xff]
        %v634 = vld [vmem:[%s5 + $0x20] sm:$0xff]
        %v635 = vld [vmem:[%s5 + $0x28] sm:$0xff]
        %v636 = vld [vmem:[%s5 + $0x30] sm:$0xff]
        %v637 = vld [vmem:[%s5 + $0x38] sm:$0xff]
        %v638 = vld [vmem:[%s5 + $0x40] sm:$0xff]
        %v639 = vld [vmem:[%s5 + $0x48] sm:$0xff]
        %v640 = vld [vmem:[%s5 + $0x50] sm:$0xff]
        %v641 = vld [vmem:[%s5 + $0x58] sm:$0xff]
        %v642 = vld [vmem:[%s5 + $0x60] sm:$0xff]
        %v643 = vld [vmem:[%s5 + $0x68] sm:$0xff]
        %v644 = vld [vmem:[%s5 + $0x70] sm:$0xff]
        %v645 = vld [vmem:[%s5 + $0x78] sm:$0xff]
        %v646 = vld [vmem:[%s5 + $0x80] sm:$0xff]
        %v647 = vld [vmem:[%s5 + $0x88] sm:$0xff]
        %v648 = vld [vmem:[%s5 + $0x90] sm:$0xff]
        %v649 = vld [vmem:[%s5 + $0x98] sm:$0xff]
        %v650 = vld [vmem:[%s5 + $0xa0] sm:$0xff]
        %v651 = vld [vmem:[%s5 + $0xa8] sm:$0xff]
        %v652 = vld [vmem:[%s5 + $0xb0] sm:$0xff]
        %v653 = vld [vmem:[%s5 + $0xb8] sm:$0xff]
        %v654 = vld [vmem:[%s5 + $0xc0] sm:$0xff]
        %v655 = vld [vmem:[%s5 + $0xc8] sm:$0xff]
        %v656 = vld [vmem:[%s5 + $0xd0] sm:$0xff]
        %v657 = vld [vmem:[%s5 + $0xd8] sm:$0xff]
        %v658 = vld [vmem:[%s5 + $0xe0] sm:$0xff]
        %v659 = vld [vmem:[%s5 + $0xe8] sm:$0xff]
        %v660 = vld [vmem:[%s5 + $0xf0] sm:$0xff]
        %v661 = vld [vmem:[%s5 + $0xf8] sm:$0xff]
        %v662 = vld [vmem:[%s6] sm:$0x3]
        %v664 = vlaneseq
        %v665 = vshrl.u32 %v664, 7
        %v666 = vsub.s32 0, %v665
        %v667 = vrot.slane %v662, %v666
        %v668 = vlaneseq
        %v669 = vshrl.u32 %v668, 7
        %v670 = vsub.s32 1, %v669
        %v671 = vrot.slane %v662, %v670
        %674 = vmatprep.subr.mxu0 %v631
        %675 = vmatpush1.msra.mxu0 %v630
        %676 = vmatprep.subr.mxu0 %v633
        %677 = vmatpush1.msra.mxu0 %v632
        %678 = vmatprep.subr.mxu0 %v635
        %679 = vmatpush1.msra.mxu0 %v634
        %680 = vmatprep.subr.mxu0 %v637
        %681 = vmatpush1.msra.mxu0 %v636
        %682 = vmatprep.subr.mxu0 %v639
        %683 = vmatpush1.msra.mxu0 %v638
        %684 = vmatprep.subr.mxu0 %v641
        %685 = vmatpush1.msra.mxu0 %v640
        %686 = vmatprep.subr.mxu0 %v643
        %687 = vmatpush1.msra.mxu0 %v642
        %688 = vmatprep.subr.mxu0 %v645
        %689 = vmatpush1.msra.mxu0 %v644
        %690 = vmatprep.subr.mxu0 %v647
        %691 = vmatpush1.msra.mxu0 %v646
        %692 = vmatprep.subr.mxu0 %v649
        %693 = vmatpush1.msra.mxu0 %v648
        %694 = vmatprep.subr.mxu0 %v651
        %695 = vmatpush1.msra.mxu0 %v650
        %696 = vmatprep.subr.mxu0 %v653
        %697 = vmatpush1.msra.mxu0 %v652
        %698 = vmatprep.subr.mxu0 %v655
        %699 = vmatpush1.msra.mxu0 %v654
        %700 = vmatprep.subr.mxu0 %v657
        %701 = vmatpush1.msra.mxu0 %v656
        %702 = vmatprep.subr.mxu0 %v659
        %703 = vmatpush1.msra.mxu0 %v658
        %704 = vmatprep.subr.mxu0 %v661
        %705 = vmatpush1.msra.mxu0 %v660
        %706 = vmatprep.subr.mxu0 0.0
        %707 = vmatpush1.msra.mxu0 0.0
        %708 = vmatprep.subr.mxu0 0.0
        %709 = vmatpush1.msra.mxu0 0.0
        %710 = vmatprep.subr.mxu0 0.0
        %711 = vmatpush1.msra.mxu0 0.0
        %712 = vmatprep.subr.mxu0 0.0
        %713 = vmatpush1.msra.mxu0 0.0
        %714 = vmatprep.subr.mxu0 0.0
        %715 = vmatpush1.msra.mxu0 0.0
        %716 = vmatprep.subr.mxu0 0.0
        %717 = vmatpush1.msra.mxu0 0.0
        %718 = vmatprep.subr.mxu0 0.0
        %719 = vmatpush1.msra.mxu0 0.0
        %720 = vmatprep.subr.mxu0 0.0
        %721 = vmatpush1.msra.mxu0 0.0
        %722 = vmatprep.subr.mxu0 0.0
        %723 = vmatpush1.msra.mxu0 0.0
        %724 = vmatprep.subr.mxu0 0.0
        %725 = vmatpush1.msra.mxu0 0.0
        %726 = vmatprep.subr.mxu0 0.0
        %727 = vmatpush1.msra.mxu0 0.0
        %728 = vmatprep.subr.mxu0 0.0
        %729 = vmatpush1.msra.mxu0 0.0
        %730 = vmatprep.subr.mxu0 0.0
        %731 = vmatpush1.msra.mxu0 0.0
        %732 = vmatprep.subr.mxu0 0.0
        %733 = vmatpush1.msra.mxu0 0.0
        %734 = vmatprep.subr.mxu0 0.0
        %735 = vmatpush1.msra.mxu0 0.0
        %736 = vmatprep.subr.mxu0 0.0
        %737 = vmatpush1.msra.mxu0 0.0
        %738 = vmatprep.mubr.f32.mxu0 0.0
        %739 = vmatmul.mubr.f32.gmra.mrb[0].mxu0 %v622
        %v740 = vpop.f32.mrb[0].mxu0
        %v741 = vadd.f32 %v667, %v740
        %v742 = vpop.f32.mrb[0].mxu0
        %v743 = vadd.f32 %v671, %v742
        %744 = vmatprep.mubr.f32.mxu0 0.0
        %745 = vmatmul.mubr.f32.gmra.mrb[0].mxu0 %v623
        %v746 = vpop.f32.mrb[0].mxu0
        %v747 = vadd.f32 %v667, %v746
        %v748 = vpop.f32.mrb[0].mxu0
        %v749 = vadd.f32 %v671, %v748
        %750 = vmatprep.mubr.f32.mxu0 0.0
        %751 = vmatmul.mubr.f32.gmra.mrb[0].mxu0 %v624
        %v752 = vpop.f32.mrb[0].mxu0
        %v753 = vadd.f32 %v667, %v752
        %v754 = vpop.f32.mrb[0].mxu0
        %v755 = vadd.f32 %v671, %v754
        %756 = vmatprep.mubr.f32.mxu0 0.0
        %757 = vmatmul.mubr.f32.gmra.mrb[0].mxu0 %v625
        %v758 = vpop.f32.mrb[0].mxu0
        %v759 = vadd.f32 %v667, %v758
        %v760 = vpop.f32.mrb[0].mxu0
        %v761 = vadd.f32 %v671, %v760
        %762 = vmatprep.mubr.f32.mxu0 0.0
        %763 = vmatmul.mubr.f32.gmra.mrb[0].mxu0 %v626
        %v764 = vpop.f32.mrb[0].mxu0
        %v765 = vadd.f32 %v667, %v764
        %v766 = vpop.f32.mrb[0].mxu0
        %v767 = vadd.f32 %v671, %v766
        %768 = vmatprep.mubr.f32.mxu0 0.0
        %769 = vmatmul.mubr.f32.gmra.mrb[0].mxu0 %v627
        %v770 = vpop.f32.mrb[0].mxu0
        %v771 = vadd.f32 %v667, %v770
        %v772 = vpop.f32.mrb[0].mxu0
        %v773 = vadd.f32 %v671, %v772
        %774 = vmatprep.mubr.f32.mxu0 0.0
        %775 = vmatmul.mubr.f32.gmra.mrb[0].mxu0 %v628
        %v776 = vpop.f32.mrb[0].mxu0
        %v777 = vadd.f32 %v667, %v776
        %v778 = vpop.f32.mrb[0].mxu0
        %v779 = vadd.f32 %v671, %v778
        %780 = vmatprep.mubr.f32.mxu0 0.0
        %781 = vmatmul.mubr.f32.gmra.mrb[0].mxu0 %v629
        %v782 = vpop.f32.mrb[0].mxu0
        %v783 = vadd.f32 %v667, %v782
        %v784 = vpop.f32.mrb[0].mxu0
        %v785 = vadd.f32 %v671, %v784
        %786 = vdwg.mxu0
        %v787 = vmax.f32 %v741, 0.0
        %v788 = vmax.f32 %v743, 0.0
        %v789 = vmax.f32 %v747, 0.0
        %v790 = vmax.f32 %v749, 0.0
        %v791 = vmax.f32 %v753, 0.0
        %v792 = vmax.f32 %v755, 0.0
        %v793 = vmax.f32 %v759, 0.0
        %v794 = vmax.f32 %v761, 0.0
        %v795 = vmax.f32 %v765, 0.0
        %v796 = vmax.f32 %v767, 0.0
        %v797 = vmax.f32 %v771, 0.0
        %v798 = vmax.f32 %v773, 0.0
        %v799 = vmax.f32 %v777, 0.0
        %v800 = vmax.f32 %v779, 0.0
        %v801 = vmax.f32 %v783, 0.0
        %v802 = vmax.f32 %v785, 0.0
        %v803 = vmax.f32 %v787, %v791
        %v804 = vmax.f32 %v789, %v793
        %v805 = vmax.f32 %v803, %v795
        %v806 = vmax.f32 %v804, %v797
        %v807 = vmax.f32 %v805, %v799
        %v808 = vmax.f32 %v806, %v801
        %v809 = vmax.f32 %v807, %v808
        %v810 = vrot.slane %v809, 4
        %v811 = vmax.f32 %v809, %v810
        %v812 = vrot.slane %v811, 2
        %v813 = vmax.f32 %v811, %v812
        %v814 = vrot.slane %v813, 1
        %v815 = vmax.f32 %v813, %v814
        %v816 = vmax.f32 %v788, %v792
        %v817 = vmax.f32 %v790, %v794
        %v818 = vmax.f32 %v816, %v796
        %v819 = vmax.f32 %v817, %v798
        %v820 = vmax.f32 %v818, %v800
        %v821 = vmax.f32 %v819, %v802
        %v822 = vmax.f32 %v820, %v821
        %v823 = vrot.slane %v822, 4
        %v824 = vmax.f32 %v822, %v823
        %v825 = vrot.slane %v824, 2
        %v826 = vmax.f32 %v824, %v825
        %v827 = vrot.slane %v826, 1
        %v828 = vmax.f32 %v826, %v827
        %p829 = scmp.eq.s32.totalorder %s27, 0
        // Predicated region
        $region53: #{tpu_custom_call.1} parent=47 // pred_check
          %p830 = pneg %p829
        $region54: #{tpu_custom_call.1} parent=47 // pred_check_branch
          %832 = sbr.rel (%p830) target = $region56
        $region55: #{tpu_custom_call.1} parent=47 // pred_region
          %v833 = vlaneseq
          %vm834 = vcmp.ge.s32.totalorder %v833, 0
          %vm835 = vcmp.lt.s32.totalorder %v833, 256
          %vm836 = vmand %vm834, %vm835
          %837 = vst.msk [vmem:[#allocation2] sm:$0x3] %vm836, -inf
        $region56: #{tpu_custom_call.1} parent=47 // pred_fallthru
          _
        %v838 = vld [vmem:[#allocation2] sm:$0x3]
        %v841 = vcombine.low %v815, %v828
        %v843 = vunpack.c.l.s4 1966171168
        %v844 = vunpack.c.0.s8 %v843
        %v845 = vlaneseq
        %v846 = vshrl.u32 %v845, 7
        %v847 = vsub.s32 %v844, %v846
        %v848 = vrot.slane %v841, %v847
        %v850 = vunpack.c.l.s4 1966171168
        %v851 = vunpack.c.0.s8 %v850
        %v852 = vlaneseq
        %v853 = vshrl.u32 %v852, 7
        %v854 = vsub.s32 %v851, %v853
        %v855 = vrot.slane %v848, %v854
        %v857 = vmax.f32 %v838, %v855
        %v858 = vlaneseq
        %vm859 = vcmp.ge.s32.totalorder %v858, 0
        %vm860 = vcmp.lt.s32.totalorder %v858, 256
        %vm861 = vmand %vm859, %vm860
        %862 = vst.msk [vmem:[#allocation2] sm:$0x3] %vm861, %v857
        %p863 = scmp.eq.s32.totalorder %s27, 1
        // Predicated region
        $region57: #{tpu_custom_call.1} parent=47 // pred_check
          %p864 = pneg %p863
        $region58: #{tpu_custom_call.1} parent=47 // pred_check_branch
          %866 = sbr.rel (%p864) target = $region60
        $region59: #{tpu_custom_call.1} parent=47 // pred_region
          %v867 = vld [vmem:[#allocation2] sm:$0x3]
          %868 = vst.msk [vmem:[%s309] sm:$0x3] %vm861, %v867
        $region60: #{tpu_custom_call.1} parent=47 // pred_fallthru
          _
        %s869 = sand.u32 %s196, 1
        %s870 = scalar_lea.sflag [#allocation5], %s869
        %s871 = sand.u32 %s196, 1
        %s872 = smul.addr %s871, 2
        %s873 = scalar_lea.vmem [#allocation6], %s872
        // Predicated region
        $region61: #{tpu_custom_call.1} parent=47 // pred_check
          %p874 = pneg %p206
        $region62: #{tpu_custom_call.1} parent=47 // pred_check_branch
          %876 = sbr.rel (%p874) target = $region64
        $region63: #{tpu_custom_call.1} parent=47 // pred_region
          %s878 = ssub.s32 32, 32
          %879 = vsyncadd %s870, %s878
          %s880 = smul.addr %s26, 2
          %s881 = smul.addr %s880, 16
          %s882 = scalar_lea.hbm %s7, %s881
          %s884 = sshll.u32 %s873, 4
          %s885 = int_to_ptr.vmem [resolvable:$true] %s884
          %887 = dma.vmem_to_hbm [thread:$0]  %s885, 32, %s882, %s870
        $region64: #{tpu_custom_call.1} parent=47 // pred_fallthru
          _
      $region48: #{tpu_custom_call.1} parent=5 // pred_fallthru
        _
      %p888 = scmp.le.s32.totalorder 2, %s17
      // Predicated region
      $region65: #{tpu_custom_call.1} parent=5 // pred_check
        %p889 = pneg %p888
      $region66: #{tpu_custom_call.1} parent=5 // pred_check_branch
        %891 = sbr.rel (%p889) target = $region68
      $region67: #{tpu_custom_call.1} parent=5 // pred_region
        %s892 = ssub.s32 %s17, 2
        // Predicated region
        $region69: #{tpu_custom_call.1} parent=67 // pred_check
          %p893 = pneg %p212
        $region70: #{tpu_custom_call.1} parent=67 // pred_check_branch
          %895 = sbr.rel (%p893) target = $region72
        $region71: #{tpu_custom_call.1} parent=67 // pred_region
          %s896 = sand.u32 %s197, 1
          %s897 = scalar_lea.sflag [#allocation5], %s896
          %s898 = sand.u32 %s197, 1
          %s899 = smul.addr %s898, 2
          %s900 = scalar_lea.vmem [#allocation6], %s899
          %901 = dma.done %s897, 32
        $region72: #{tpu_custom_call.1} parent=67 // pred_fallthru
          _
      $region68: #{tpu_custom_call.1} parent=5 // pred_fallthru
        _
    $region6: #{tpu_custom_call.1} parent=1 // loop_footer
      %s21 = sadd.s32 1, %s17
    $region7: #{tpu_custom_call.1} parent=1 // loop_footer_branch
      %16 = sbr.rel target = $region3
    $region8: #{tpu_custom_call.1} parent=1 // loop_exit
      _
    %902 = vsyncpa [#allocation4], 1
    %s903 = scalar_lea.sflag [#allocation4], 1
    %904 = vsyncpa %s903, 1
    %905 = vsyncpa [#allocation5], 1
    %s906 = scalar_lea.sflag [#allocation5], 1
    %907 = vsyncpa %s906, 1

</llo_original>
